<compile_context>
chip_gen: v5e
topology: v5e:2x2
jax: 0.10.0
libtpu: 0.0.40
codegen_flags: <defaults>
</compile_context>

<pallas_src>
import jax
import jax.numpy as jnp
from jax.experimental import pallas as pl
from jax.experimental.pallas import tpu as pltpu


_SUBLANES = 8
_LANES = 128
# Per-block byte cap for dist_n (double-buffered by the pipeline).  Chosen so
# 2 * cap stays well under v5e's 16 MiB default scoped VMEM; also fine for
# v7x's smaller (64 MiB physical / 32 MiB scoped) VMEM.
_BLOCK_BYTES_CAP = 4 * 1024 * 1024


def _loss_rows(dp, dn, margin, num_item, n):
    """Per-row weighted loss.  dp: (tb, 1) f32, dn: (tb, n) f32 -> (tb, 1)."""
    t = dp + margin                                        # hoisted, reused twice
    closest = jnp.min(dn, axis=1, keepdims=True)           # (tb, 1)  XLU reduce
    loss = jnp.maximum(t - closest, 0.0)                   # relu     VPU
    imposter = (t - dn) > 0.0                              # (tb, n)  VPU compare
    num_imp = jnp.sum(imposter.astype(jnp.float32), axis=1, keepdims=True)
    rank = num_imp * (float(num_item) / float(n))          # constant pre-folded
    weight = jnp.log(rank + 1.0)                           # EUP
    return loss * weight                                   # (tb, 1)


def _pick_block_b(B, N):
    """Largest batch tile TB that divides B, is a multiple of 8 and fits the
    per-block VMEM budget.  Returns B itself (gridless) for small problems,
    None if no valid tile exists (caller falls back to gridless)."""
    if B * N * 4 <= _BLOCK_BYTES_CAP:
        return B
    best = None
    for tb in range(_SUBLANES, B + 1, _SUBLANES):
        if B % tb == 0 and tb * N * 4 <= _BLOCK_BYTES_CAP:
            best = tb
    return best


def make_embedding_loss(margin: float, num_item: int, B: int, N: int,
                        block_b: int | None = None):
    """Build a pallas_call computing the Embedding_loss forward pass.

    Note: the mean divides by the compile-time B; callers must not pad the
    batch (padded rows would corrupt both the min over N and the mean).
    """
    if block_b is None:
        block_b = _pick_block_b(B, N)
    else:
        assert B % block_b == 0, "block_b must divide B"
        assert block_b % _SUBLANES == 0 or block_b == B, \
            "block_b must be a multiple of 8 (or equal to B)"

    cost = pl.CostEstimate(
        flops=int(5 * B * N + 10 * B),
        transcendentals=int(B),
        bytes_accessed=int(4 * B * N + 4 * B + 4),
    )

    # ------------------------------------------------------------------ #
    # Path 1: whole problem in one block (tiny / moderate B*N).          #
    # ------------------------------------------------------------------ #
    if block_b is None or block_b == B:
        def kernel_small(dp_ref, dn_ref, out_ref):
            wloss = _loss_rows(dp_ref[...], dn_ref[...], margin, num_item, N)
            out_ref[0, 0] = jnp.sum(wloss) * (1.0 / float(B))

        compiler_params = None
        if block_b is None:
            # TODO(synk): no batch tile fits the conservative budget (odd B or
            # huge N); run un-pipelined with a raised VMEM limit instead.
            need = 2 * (B * N * 4 + B * 4) + (8 << 20)
            compiler_params = pltpu.CompilerParams(
                vmem_limit_bytes=min(need, 96 << 20))

        call = pl.pallas_call(
            kernel_small,
            out_shape=jax.ShapeDtypeStruct((1, 1), jnp.float32),
            in_specs=[
                pl.BlockSpec(memory_space=pltpu.VMEM),   # dist_p (B, 1)
                pl.BlockSpec(memory_space=pltpu.VMEM),   # dist_n (B, N)
            ],
            out_specs=pl.BlockSpec(memory_space=pltpu.SMEM),
            compiler_params=compiler_params,
            cost_estimate=cost,
        )

        def forward(dist_p, dist_n):
            assert dist_p.shape == (B,) and dist_n.shape == (B, N)
            dp2 = dist_p.reshape(B, 1).astype(jnp.float32)
            dn2 = dist_n.astype(jnp.float32)
            return call(dp2, dn2)[0, 0]

        return forward

    # ------------------------------------------------------------------ #
    # Path 2: B-tiled pipelined grid, per-block partial sums.            #
    # ------------------------------------------------------------------ #
    tb = block_b
    nb = B // tb

    def kernel_tiled(dp_ref, dn_ref, out_ref):
        wloss = _loss_rows(dp_ref[...], dn_ref[...], margin, num_item, N)
        psum = jnp.sum(wloss)                              # scalar partial sum
        # Lane-dense (1, 8, 128) store: unmasked vst, parallel-safe per block.
        out_ref[...] = jnp.broadcast_to(psum, out_ref.shape).astype(jnp.float32)

    call = pl.pallas_call(
        kernel_tiled,
        out_shape=jax.ShapeDtypeStruct((nb, _SUBLANES, _LANES), jnp.float32),
        grid=(nb,),
        in_specs=[
            pl.BlockSpec((tb, 1), lambda i: (i, 0)),       # dist_p block
            pl.BlockSpec((tb, N), lambda i: (i, 0)),       # dist_n block
        ],
        out_specs=pl.BlockSpec((1, _SUBLANES, _LANES), lambda i: (i, 0, 0)),
        compiler_params=pltpu.CompilerParams(
            dimension_semantics=("parallel",)),            # v7x: 2 TCs
        cost_estimate=cost,
    )

    def forward(dist_p, dist_n):
        assert dist_p.shape == (B,) and dist_n.shape == (B, N)
        dp2 = dist_p.reshape(B, 1).astype(jnp.float32)
        dn2 = dist_n.astype(jnp.float32)
        partial = call(dp2, dn2)[:, 0, 0]                  # (nb,) partial sums
        return jnp.sum(partial) * (1.0 / float(B))

    return forward


def make_batched_embedding_loss(margin: float, num_item: int,
                                T: int, B: int, N: int):
    """Many MAML tasks per pallas_call: dist_p (T, B), dist_n (T, B, N) ->
    per-task losses (T,).  One launch amortizes the custom-call overhead; the
    task axis is "parallel" so v7x shards it across both TensorCores."""

    def kernel(dp_ref, dn_ref, out_ref):
        wloss = _loss_rows(dp_ref[0], dn_ref[0], margin, num_item, N)  # (B, 1)
        task_loss = jnp.sum(wloss) * (1.0 / float(B))
        out_ref[...] = jnp.broadcast_to(task_loss, out_ref.shape).astype(jnp.float32)

    cost = pl.CostEstimate(
        flops=int(T * (5 * B * N + 10 * B)),
        transcendentals=int(T * B),
        bytes_accessed=int(T * (4 * B * N + 4 * B) + T * 4),
    )

    call = pl.pallas_call(
        kernel,
        out_shape=jax.ShapeDtypeStruct((T, _SUBLANES, _LANES), jnp.float32),
        grid=(T,),
        in_specs=[
            pl.BlockSpec((1, B, 1), lambda t: (t, 0, 0)),  # dist_p task block
            pl.BlockSpec((1, B, N), lambda t: (t, 0, 0)),  # dist_n task block
        ],
        out_specs=pl.BlockSpec((1, _SUBLANES, _LANES), lambda t: (t, 0, 0)),
        compiler_params=pltpu.CompilerParams(
            dimension_semantics=("parallel",)),
        cost_estimate=cost,
    )

    def forward(dist_p, dist_n):
        assert dist_p.shape == (T, B) and dist_n.shape == (T, B, N)
        dp3 = dist_p.reshape(T, B, 1).astype(jnp.float32)
        dn3 = dist_n.astype(jnp.float32)
        return call(dp3, dn3)[:, 0, 0]                     # (T,) per-task losses

    return forward


def embedding_loss_ref(dist_p, dist_n, margin, num_item):
    """Pure-JAX reference for correctness checking."""
    closest = jnp.min(dist_n, axis=1)
    loss = jax.nn.relu(margin + dist_p - closest)
    num_imp = jnp.sum((margin + dist_p[:, None] - dist_n) > 0, axis=1)
    rank = num_imp.astype(jnp.float32) * num_item / dist_n.shape[1]
    weight = jnp.log(rank + 1.0)
    return jnp.mean(loss * weight)


if __name__ == "__main__":
    margin = 0.5
    num_item = 1000

    key = jax.random.PRNGKey(0)
    k1, k2, k3, k4, k5, k6 = jax.random.split(key, 6)

    # --- Case 1: tiny single-task problem (gridless fast path) ------------
    B, N = 8, 128
    dist_p = jax.random.uniform(k1, (B,), dtype=jnp.float32) * 2.0
    dist_n = jax.random.uniform(k2, (B, N), dtype=jnp.float32) * 2.0
    fwd = make_embedding_loss(margin, num_item, B, N)
    out = jax.block_until_ready(fwd(dist_p, dist_n))
    ref = embedding_loss_ref(dist_p, dist_n, margin, num_item)
    assert jnp.allclose(out, ref, rtol=1e-5, atol=1e-5), (out, ref)

    # --- Case 2: B-tiled pipelined path (block_b forces the grid at small
    #     demo shapes; production picks it automatically from B*N) --------
    B2, N2 = 64, 256
    dist_p2 = jax.random.uniform(k3, (B2,), dtype=jnp.float32) * 2.0
    dist_n2 = jax.random.uniform(k4, (B2, N2), dtype=jnp.float32) * 2.0
    fwd2 = make_embedding_loss(margin, num_item, B2, N2, block_b=16)
    out2 = jax.block_until_ready(fwd2(dist_p2, dist_n2))
    ref2 = embedding_loss_ref(dist_p2, dist_n2, margin, num_item)
    assert jnp.allclose(out2, ref2, rtol=1e-5, atol=1e-5), (out2, ref2)

    # --- Case 3: many MAML tasks batched into one pallas_call -------------
    T = 4
    dist_p3 = jax.random.uniform(k5, (T, B), dtype=jnp.float32) * 2.0
    dist_n3 = jax.random.uniform(k6, (T, B, N), dtype=jnp.float32) * 2.0
    fwd3 = make_batched_embedding_loss(margin, num_item, T, B, N)
    out3 = jax.block_until_ready(fwd3(dist_p3, dist_n3))
    ref3 = jax.vmap(
        lambda p, n: embedding_loss_ref(p, n, margin, num_item))(dist_p3, dist_n3)
    assert jnp.allclose(out3, ref3, rtol=1e-5, atol=1e-5), (out3, ref3)

    print("KERNEL_OK")
</pallas_src>

<mosaic_0001>
module attributes {stable_mosaic.version = 11 : i64} {
  func.func @kernel_small(%arg0: memref<8x1xf32, #tpu.memory_space<vmem>>, %arg1: memref<8x128xf32, #tpu.memory_space<vmem>>, %arg2: memref<1x1xf32, #tpu.memory_space<smem>>) attributes {dimension_semantics = [], scalar_prefetch = 0 : i64, scratch_operands = 0 : i64, tpu.core_type = #tpu.core_type<tc>} {
    %c0 = arith.constant 0 : index
    %c0_0 = arith.constant 0 : index
    %0 = vector.load %arg0[%c0, %c0_0] : memref<8x1xf32, #tpu.memory_space<vmem>>, vector<8x1xf32>
    %c0_1 = arith.constant 0 : index
    %c0_2 = arith.constant 0 : index
    %1 = vector.load %arg1[%c0_1, %c0_2] : memref<8x128xf32, #tpu.memory_space<vmem>>, vector<8x128xf32>
    %cst = arith.constant 5.000000e-01 : f32
    %2 = vector.broadcast %cst : f32 to vector<8x1xf32>
    %3 = arith.addf %0, %2 : vector<8x1xf32>
    %cst_3 = arith.constant dense<0x7F800000> : vector<8xf32>
    %4 = vector.multi_reduction <minimumf>, %1, %cst_3 [1] : vector<8x128xf32> to vector<8xf32>
    %5 = vector.shape_cast %4 : vector<8xf32> to vector<8x1xf32>
    %6 = arith.subf %3, %5 : vector<8x1xf32>
    %cst_4 = arith.constant 0.000000e+00 : f32
    %7 = vector.broadcast %cst_4 : f32 to vector<8x1xf32>
    %8 = arith.maximumf %6, %7 : vector<8x1xf32>
    %9 = vector.broadcast %3 : vector<8x1xf32> to vector<8x128xf32>
    %10 = arith.subf %9, %1 : vector<8x128xf32>
    %cst_5 = arith.constant 0.000000e+00 : f32
    %11 = vector.broadcast %cst_5 : f32 to vector<8x128xf32>
    %12 = arith.cmpf ogt, %10, %11 : vector<8x128xf32>
    %13 = arith.extui %12 : vector<8x128xi1> to vector<8x128xi32>
    %14 = arith.sitofp %13 : vector<8x128xi32> to vector<8x128xf32>
    %cst_6 = arith.constant dense<0.000000e+00> : vector<8xf32>
    %15 = vector.multi_reduction <add>, %14, %cst_6 [1] : vector<8x128xf32> to vector<8xf32>
    %16 = vector.shape_cast %15 : vector<8xf32> to vector<8x1xf32>
    %cst_7 = arith.constant 7.812500e+00 : f32
    %17 = vector.broadcast %cst_7 : f32 to vector<8x1xf32>
    %18 = arith.mulf %16, %17 : vector<8x1xf32>
    %cst_8 = arith.constant 1.000000e+00 : f32
    %19 = vector.broadcast %cst_8 : f32 to vector<8x1xf32>
    %20 = arith.addf %18, %19 : vector<8x1xf32>
    %21 = math.log %20 : vector<8x1xf32>
    %22 = arith.mulf %8, %21 : vector<8x1xf32>
    %23 = vector.shape_cast %22 : vector<8x1xf32> to vector<1x8x1xf32>
    %cst_9 = arith.constant dense<0.000000e+00> : vector<1xf32>
    %24 = vector.multi_reduction <add>, %23, %cst_9 [1, 2] : vector<1x8x1xf32> to vector<1xf32>
    %25 = vector.shape_cast %24 : vector<1xf32> to vector<1x1x1xf32>
    %26 = vector.extract %25[0, 0, 0] : f32 from vector<1x1x1xf32>
    %cst_10 = arith.constant 1.250000e-01 : f32
    %27 = arith.mulf %26, %cst_10 : f32
    %c0_11 = arith.constant 0 : index
    %c0_12 = arith.constant 0 : index
    %28 = memref.load %arg2[%c0_11, %c0_12] : memref<1x1xf32, #tpu.memory_space<smem>>
    memref.store %27, %arg2[%c0_11, %c0_12] : memref<1x1xf32, #tpu.memory_space<smem>>
    return
  }
}

</mosaic_0001>

<llo_original>
// kernel: tpu_custom_call.1
$region0: #{tpu_custom_call.1}
  #allocation0 [shape = 'u32[]', space=smem, size = 0x4, offset = 0x4, fixed_abs, tag = 'smem constant byte address 0x4 - core index']
  #allocation1 [shape = 'u32[72,128]{1,0:T(1,128)}', space=vmem, size = 0x9000, scoped, tag = 'internal scratch']
  %s0 = inlined_call_operand.vmem [shape: f32[8,1], index: 0, kind: input, shape index: {}]
  %s1 = inlined_call_operand.vmem [shape: f32[8,128], index: 1, kind: input, shape index: {}]
  %s2 = inlined_call_operand.hbm [shape: f32[1,1], index: 2, kind: output, shape index: {}]
  %s3 = sld [smem:[#allocation0]]
  $region18: #{tpu_custom_call.1} parent=0
    _
  %s5 = ssub.s32 1, %s3
  %s6 = scalar_select 0, %s5, %s3
  $region1: #{tpu_custom_call.1} parent=0
    #allocation2 [shape = 'u8[512]{0}', space=smem, size = 0x200, scoped, tag = 'output window, operand 0, single buffered']
    #allocation3 [shape = 's32[1]{0}', space=sflag, size = 0x4, scoped, tag = 'scoped memory for tpu_custom_call.1']
    %7 = vsyncpa [#allocation3], 0
    // Predicated region
    $region2: #{tpu_custom_call.1} parent=1 // pred_check
      _
    $region3: #{tpu_custom_call.1} parent=1 // pred_check_branch
      %9 = sbr.rel (0) target = $region5
    $region4: #{tpu_custom_call.1} parent=1 // pred_region
      _
    $region5: #{tpu_custom_call.1} parent=1 // pred_fallthru
      _
    // Predicated region
    $region6: #{tpu_custom_call.1} parent=1 // pred_check
      _
    $region7: #{tpu_custom_call.1} parent=1 // pred_check_branch
      %11 = sbr.rel (0) target = $region9
    $region8: #{tpu_custom_call.1} parent=1 // pred_region
      _
    $region9: #{tpu_custom_call.1} parent=1 // pred_fallthru
      _
    %v12 = vld [vmem:[%s0] sm:$0xff]
    %v13 = vld [vmem:[%s1] sm:$0xff]
    %v14 = vadd.f32 %v12, 0.5
    %15 = vmin.xlane.f32.xlu0 %v13
    %v16 = vpop.xlane.xlu0 %15
    %v17 = vsub.f32 %v14, %v16
    %v18 = vmax.f32 %v17, 0.0
    %20 = vset.pattern.permute.xlu0 0
    %21 = vperm.xlu0 %20, %v14
    %v22 = vpop.permute.xlu0 %21
    %v24 = vsub.f32 %v22, %v13
    %vm25 = vcmp.gt.f32.partialorder %v24, 0.0
    %v26 = vsel %vm25, 1, 0
    %v27 = vcvt.s32.f32 %v26
    %28 = vadd.xlane.f32.xlu0 %v27
    %v29 = vpop.xlane.xlu0 %28
    %v30 = vmul.f32 %v29, 7.8125
    %v31 = vadd.f32 %v30, 1.0
    %v32 = vlog2.pop %v31
    %v33 = vmul.f32 %v32, 0.6931472
    %v34 = vmul.f32 %v18, %v33
    %vm35 = vcmask 7168
    %v36 = vsel %vm35, %v34, 0.0
    %37 = vadd.xlane.f32.xlu0 %v36
    %v38 = vpop.xlane.xlu0 %37
    %v39 = vrot.slane %v38, 4
    %v40 = vadd.f32 %v38, %v39
    %v41 = vrot.slane %v40, 2
    %v42 = vadd.f32 %v40, %v41
    %v43 = vrot.slane %v42, 1
    %v44 = vadd.f32 %v42, %v43
    %s45 = vtos %v44
    %s46 = smul.f32 %s45, 0.125
    %s47 = scalar_lea.smem [#allocation2], 0
    %48 = sst [smem:[%s47]] %s46
    // Predicated region
    $region10: #{tpu_custom_call.1} parent=1 // pred_check
      _
    $region11: #{tpu_custom_call.1} parent=1 // pred_check_branch
      %50 = sbr.rel (0) target = $region13
    $region12: #{tpu_custom_call.1} parent=1 // pred_region
      %52 = vsyncadd [#allocation3], 0
      %s54 = sshll.u32 %s2, 4
      %s55 = int_to_ptr.hbm [resolvable:$true] %s54
      %57 = dma.smem_to_hbm [#allocation2], 16, %s55, [#allocation3]
    $region13: #{tpu_custom_call.1} parent=1 // pred_fallthru
      _
    // Predicated region
    $region14: #{tpu_custom_call.1} parent=1 // pred_check
      _
    $region15: #{tpu_custom_call.1} parent=1 // pred_check_branch
      %59 = sbr.rel (0) target = $region17
    $region16: #{tpu_custom_call.1} parent=1 // pred_region
      %61 = dma.done [#allocation3], 16
    $region17: #{tpu_custom_call.1} parent=1 // pred_fallthru
      _
    %62 = sfence
    %63 = vsyncpa [#allocation3], 1

</llo_original>
